<compile_context>
chip_gen: v5e
topology: v5e:2x2
jax: 0.10.0
libtpu: 0.0.40
codegen_flags: <defaults>
</compile_context>

<pallas_src>
import functools

import jax
import jax.numpy as jnp
import numpy as np
from jax import lax
from jax.experimental import pallas as pl
from jax.experimental.pallas import tpu as pltpu

EPS = 1e-5
_MAX_LANE_TILE = 65536  # cap on lane-tile width (lanes of f32)


def _round_up(x: int, m: int) -> int:
    return -(-x // m) * m


def _budgets():
    """Returns (vmem_limit_bytes, per-block byte budget, fused x-array byte cap)."""
    try:
        cap = pltpu.get_tpu_info().vmem_capacity_bytes
    except Exception:  # no TPU info available -> assume the smallest (v7x, 64 MiB)
        cap = 64 * 1024 * 1024
    if cap >= 100 * 1024 * 1024:  # v5e / v6e: 128 MiB physical VMEM
        return 64 * 1024 * 1024, 4 * 1024 * 1024, 16 * 1024 * 1024
    # v7x: 64 MiB physical VMEM -> keep 2-in + 2-out buffers well under the limit
    return 32 * 1024 * 1024, 2 * 1024 * 1024, 8 * 1024 * 1024


def _pick_lane_tile(hw: int, c: int, block_byte_budget: int) -> int:
    """Lane-tile width: multiple of 128, sized from the PADDED-C block footprint."""
    c_pad = _round_up(max(c, 1), 8)  # f32 sublane padding
    lanes = (block_byte_budget // (4 * c_pad)) // 128 * 128
    lanes = max(128, min(lanes, _MAX_LANE_TILE))
    if hw <= lanes:
        return hw  # full extent is always a legal block dim
    # Prefer a divisor of HW near the budget (avoids masked edge blocks); otherwise
    # keep the budgeted size and let cdiv + masking handle the remainder.
    t = lanes
    floor = max(128, lanes // 2)
    while t >= floor:
        if hw % t == 0:
            return t
        t -= 128
    return lanes


# ---------------- Pass 1: per-(batch, outer-split, channel) partial sums -----
def _chan_sum_kernel(x_ref, psum_ref, *, t_hw, hw, n_inner, lanes, need_mask):
    # psum block stays resident across the 'arbitrary' inner spatial-tile axis.
    @pl.when(pl.program_id(2) == 0)
    def _init():
        psum_ref[...] = jnp.zeros_like(psum_ref)

    xf = x_ref[...].astype(jnp.float32)  # (1, C, t_hw), C on sublanes
    if need_mask:
        j = pl.program_id(1) * n_inner + pl.program_id(2)  # global block idx along HW
        lane = lax.broadcasted_iota(jnp.int32, xf.shape, 2)
        xf = jnp.where(lane + j * t_hw < hw, xf, 0.0)

    c = xf.shape[1]
    if lanes == 128:
        # Lane-wide partials: VALU adds across 128-lane groups only; no cross-lane
        # reduce and an unmasked (C, 128) store.
        part = jnp.sum(xf.reshape(c, t_hw // 128, 128), axis=1)  # (C, 128)
    else:
        part = jnp.sum(xf, axis=2).reshape(c, 1)  # tiny-HW fallback
    psum_ref[...] += part.reshape(psum_ref.shape)


# ---------------- Pass 2: subtract channel mean + LayerNorm over C -----------
def _norm_kernel(x_ref, params_ref, o_ref):
    xf = x_ref[...].astype(jnp.float32)  # (1, C, t_hw), C on sublanes
    p = params_ref[...]                  # (3, C, 1): [cmean, weight, bias]
    y = xf - p[0:1]                      # x - channel mean
    mu = jnp.mean(y, axis=1, keepdims=True)           # LayerNorm mean over C (sublanes)
    yc = y - mu
    var = jnp.mean(yc * yc, axis=1, keepdims=True)    # biased variance
    inv = lax.rsqrt(var + EPS)
    o_ref[...] = (yc * inv * p[1:2] + p[2:3]).astype(o_ref.dtype)


# ---------------- Fused single-pass kernel (whole tensor VMEM-resident) ------
def _fused_kernel(x_ref, params_ref, o_ref, *, inv_count):
    xf = x_ref[...].astype(jnp.float32)               # (N, C, HW)
    csum = jnp.sum(xf, axis=0, keepdims=True)         # (1, C, HW)
    cmean = jnp.sum(csum, axis=2, keepdims=True) * inv_count   # (1, C, 1)
    y = xf - cmean
    mu = jnp.mean(y, axis=1, keepdims=True)
    yc = y - mu
    var = jnp.mean(yc * yc, axis=1, keepdims=True)
    inv = lax.rsqrt(var + EPS)
    p = params_ref[...]                                # (2, C, 1): [weight, bias]
    o_ref[...] = (yc * inv * p[0:1] + p[1:2]).astype(o_ref.dtype)


# ---------------- Wrapper -----------------------------------------------------
def channel_norm(x_nchw, weight, bias, *, force_two_pass=False):
    """ChannelNorm on an NCHW tensor, operating in the native layout (no transposes)."""
    N, C, H, W = x_nchw.shape
    HW = H * W
    x3 = x_nchw.reshape(N, C, HW)  # free reshape (contiguous), no transpose

    vmem_limit, block_budget, fused_cap = _budgets()
    c_pad = _round_up(C, 8)
    inv_count = 1.0 / float(N * HW)

    w32 = weight.astype(jnp.float32).reshape(C, 1)
    b32 = bias.astype(jnp.float32).reshape(C, 1)

    # ---- Fused single-pass path: x read from HBM once instead of twice. ----
    if (not force_two_pass) and N * c_pad * HW * 4 <= fused_cap:
        params = jnp.stack([w32, b32], axis=0)  # (2, C, 1)
        out3 = pl.pallas_call(
            functools.partial(_fused_kernel, inv_count=inv_count),
            out_shape=jax.ShapeDtypeStruct((N, C, HW), x_nchw.dtype),
            compiler_params=pltpu.CompilerParams(vmem_limit_bytes=vmem_limit),
        )(x3, params)
        return out3.reshape(N, C, H, W)

    # ---- Two-pass streaming path. ----
    t_hw = _pick_lane_tile(HW, C, block_budget)
    grid_hw = pl.cdiv(HW, t_hw)
    need_mask = (HW % t_hw) != 0
    lanes = 128 if (t_hw % 128 == 0) else 1

    # v7x: guarantee a 'parallel' axis with >=2 iterations in pass 1 even when N==1.
    n_outer = 2 if (N == 1 and grid_hw >= 2 and grid_hw % 2 == 0) else 1
    n_inner = grid_hw // n_outer

    # Pass 1: per-(batch, outer) partial channel sums.
    psum = pl.pallas_call(
        functools.partial(_chan_sum_kernel, t_hw=t_hw, hw=HW,
                          n_inner=n_inner, lanes=lanes, need_mask=need_mask),
        out_shape=jax.ShapeDtypeStruct((N, n_outer, C, lanes), jnp.float32),
        grid=(N, n_outer, n_inner),
        in_specs=[pl.BlockSpec((1, C, t_hw),
                               lambda n, o, i: (n, 0, o * n_inner + i))],
        out_specs=pl.BlockSpec((1, 1, C, lanes), lambda n, o, i: (n, o, 0, 0)),
        compiler_params=pltpu.CompilerParams(
            dimension_semantics=("parallel", "parallel", "arbitrary"),
            vmem_limit_bytes=vmem_limit),
    )(x3)

    # Tiny finish in XLA: collapse N, outer split and the 128 partial lanes.
    cmean = jnp.sum(psum, axis=(0, 1, 3)) * inv_count  # (C,)

    # Fold the three grid-invariant (C,) vectors into one small constant operand.
    params = jnp.stack([cmean.reshape(C, 1), w32, b32], axis=0)  # (3, C, 1)

    # Pass 2: (x - cmean) then LayerNorm over C, fully parallel grid.
    # Padded lanes of edge blocks are never written back, so no mask is needed.
    out3 = pl.pallas_call(
        _norm_kernel,
        out_shape=jax.ShapeDtypeStruct((N, C, HW), x_nchw.dtype),
        grid=(N, grid_hw),
        in_specs=[
            pl.BlockSpec((1, C, t_hw), lambda n, j: (n, 0, j)),
            pl.BlockSpec((3, C, 1), lambda n, j: (0, 0, 0)),  # grid-invariant constants
        ],
        out_specs=pl.BlockSpec((1, C, t_hw), lambda n, j: (n, 0, j)),
        compiler_params=pltpu.CompilerParams(
            dimension_semantics=("parallel", "parallel"),
            vmem_limit_bytes=vmem_limit),
    )(x3, params)

    return out3.reshape(N, C, H, W)


# ---------------- Pure-JAX reference ------------------------------------------
def channel_norm_ref(x_nchw, weight, bias):
    x = jnp.transpose(x_nchw, (0, 2, 3, 1)).astype(jnp.float32)  # NHWC
    cmean = jnp.mean(x, axis=(0, 1, 2))                          # (C,)
    y = x - cmean
    mu = jnp.mean(y, axis=-1, keepdims=True)
    var = jnp.mean((y - mu) ** 2, axis=-1, keepdims=True)
    out = (y - mu) / jnp.sqrt(var + EPS) * weight + bias
    return jnp.transpose(out, (0, 3, 1, 2)).astype(x_nchw.dtype)


if __name__ == "__main__":
    key = jax.random.PRNGKey(0)
    kx, kw, kb = jax.random.split(key, 3)

    N, C, H, W = 2, 4, 16, 16
    x = jax.random.normal(kx, (N, C, H, W), dtype=jnp.float32)
    # Parameter shapes from nn.LayerNorm(C): weight (C,), bias (C,).
    weight = 1.0 + 0.1 * jax.random.normal(kw, (C,), dtype=jnp.float32)
    bias = 0.1 * jax.random.normal(kb, (C,), dtype=jnp.float32)

    ref = channel_norm_ref(x, weight, bias)

    # Small tensor -> exercises the fused single-pass path.
    out_fused = jax.block_until_ready(channel_norm(x, weight, bias))
    np.testing.assert_allclose(np.asarray(out_fused), np.asarray(ref),
                               atol=1e-4, rtol=1e-4)

    # Also exercise the tiled two-pass streaming path.
    out_tiled = jax.block_until_ready(
        channel_norm(x, weight, bias, force_two_pass=True))
    np.testing.assert_allclose(np.asarray(out_tiled), np.asarray(ref),
                               atol=1e-4, rtol=1e-4)

    print("KERNEL_OK")
</pallas_src>

<mosaic_0001>
module attributes {stable_mosaic.version = 11 : i64} {
  func.func @_fused_kernel(%arg0: memref<2x4x256xf32, #tpu.memory_space<vmem>>, %arg1: memref<2x4x1xf32, #tpu.memory_space<vmem>>, %arg2: memref<2x4x256xf32, #tpu.memory_space<vmem>>) attributes {dimension_semantics = [], scalar_prefetch = 0 : i64, scratch_operands = 0 : i64, tpu.core_type = #tpu.core_type<tc>} {
    %c0 = arith.constant 0 : index
    %c0_0 = arith.constant 0 : index
    %c0_1 = arith.constant 0 : index
    %0 = vector.load %arg0[%c0, %c0_0, %c0_1] : memref<2x4x256xf32, #tpu.memory_space<vmem>>, vector<2x4x256xf32>
    %cst = arith.constant dense<0.000000e+00> : vector<4x256xf32>
    %1 = vector.multi_reduction <add>, %0, %cst [0] : vector<2x4x256xf32> to vector<4x256xf32>
    %2 = vector.shape_cast %1 : vector<4x256xf32> to vector<1x4x256xf32>
    %cst_2 = arith.constant dense<0.000000e+00> : vector<1x4xf32>
    %3 = vector.multi_reduction <add>, %2, %cst_2 [2] : vector<1x4x256xf32> to vector<1x4xf32>
    %4 = vector.shape_cast %3 : vector<1x4xf32> to vector<1x4x1xf32>
    %cst_3 = arith.constant 0.001953125 : f32
    %5 = vector.broadcast %cst_3 : f32 to vector<1x4x1xf32>
    %6 = arith.mulf %4, %5 : vector<1x4x1xf32>
    %7 = vector.broadcast %6 : vector<1x4x1xf32> to vector<2x4x256xf32>
    %8 = arith.subf %0, %7 : vector<2x4x256xf32>
    %cst_4 = arith.constant dense<0.000000e+00> : vector<2x256xf32>
    %9 = vector.multi_reduction <add>, %8, %cst_4 [1] : vector<2x4x256xf32> to vector<2x256xf32>
    %10 = vector.shape_cast %9 : vector<2x256xf32> to vector<2x1x256xf32>
    %cst_5 = arith.constant 4.000000e+00 : f32
    %11 = vector.broadcast %cst_5 : f32 to vector<2x1x256xf32>
    %12 = arith.divf %10, %11 : vector<2x1x256xf32>
    %13 = vector.broadcast %12 : vector<2x1x256xf32> to vector<2x4x256xf32>
    %14 = arith.subf %8, %13 : vector<2x4x256xf32>
    %15 = arith.mulf %14, %14 : vector<2x4x256xf32>
    %cst_6 = arith.constant dense<0.000000e+00> : vector<2x256xf32>
    %16 = vector.multi_reduction <add>, %15, %cst_6 [1] : vector<2x4x256xf32> to vector<2x256xf32>
    %17 = vector.shape_cast %16 : vector<2x256xf32> to vector<2x1x256xf32>
    %cst_7 = arith.constant 4.000000e+00 : f32
    %18 = vector.broadcast %cst_7 : f32 to vector<2x1x256xf32>
    %19 = arith.divf %17, %18 : vector<2x1x256xf32>
    %cst_8 = arith.constant 9.99999974E-6 : f32
    %20 = vector.broadcast %cst_8 : f32 to vector<2x1x256xf32>
    %21 = arith.addf %19, %20 : vector<2x1x256xf32>
    %22 = math.rsqrt %21 : vector<2x1x256xf32>
    %c0_9 = arith.constant 0 : index
    %c0_10 = arith.constant 0 : index
    %c0_11 = arith.constant 0 : index
    %23 = vector.load %arg1[%c0_9, %c0_10, %c0_11] : memref<2x4x1xf32, #tpu.memory_space<vmem>>, vector<2x4x1xf32>
    %24 = vector.broadcast %22 : vector<2x1x256xf32> to vector<2x4x256xf32>
    %25 = arith.mulf %14, %24 : vector<2x4x256xf32>
    %26 = vector.extract_strided_slice %23 {offsets = [0, 0, 0], sizes = [1, 4, 1], strides = [1, 1, 1]} : vector<2x4x1xf32> to vector<1x4x1xf32>
    %27 = vector.broadcast %26 : vector<1x4x1xf32> to vector<2x4x256xf32>
    %28 = arith.mulf %25, %27 : vector<2x4x256xf32>
    %29 = vector.extract_strided_slice %23 {offsets = [1, 0, 0], sizes = [1, 4, 1], strides = [1, 1, 1]} : vector<2x4x1xf32> to vector<1x4x1xf32>
    %30 = vector.broadcast %29 : vector<1x4x1xf32> to vector<2x4x256xf32>
    %31 = arith.addf %28, %30 : vector<2x4x256xf32>
    %c0_12 = arith.constant 0 : index
    %c0_13 = arith.constant 0 : index
    %c0_14 = arith.constant 0 : index
    %32 = vector.load %arg2[%c0_12, %c0_13, %c0_14] : memref<2x4x256xf32, #tpu.memory_space<vmem>>, vector<2x4x256xf32>
    tpu.vector_store %arg2[%c0_12, %c0_13, %c0_14], %31 {strides = array<i32>} : memref<2x4x256xf32, #tpu.memory_space<vmem>>, vector<2x4x256xf32>,
    return
  }
}

</mosaic_0001>

<llo_original>
// kernel: tpu_custom_call.1
$region0: #{tpu_custom_call.1}
  #allocation0 [shape = 'u32[]', space=smem, size = 0x4, offset = 0x4, fixed_abs, tag = 'smem constant byte address 0x4 - core index']
  #allocation1 [shape = 'u32[72,128]{1,0:T(1,128)}', space=vmem, size = 0x9000, scoped, tag = 'internal scratch']
  %s0 = inlined_call_operand.hbm [shape: f32[2,4,256], index: 0, kind: input, shape index: {}]
  %s1 = inlined_call_operand.vmem [shape: f32[2,4,1], index: 1, kind: input, shape index: {}]
  %s2 = inlined_call_operand.hbm [shape: f32[2,4,256], index: 2, kind: output, shape index: {}]
  %s3 = sld [smem:[#allocation0]]
  $region22: #{tpu_custom_call.1} parent=0
    _
  %s5 = ssub.s32 1, %s3
  %s6 = scalar_select 0, %s5, %s3
  $region1: #{tpu_custom_call.1} parent=0
    #allocation2 [shape = 'u8[8192]{0}', space=vmem, size = 0x2000, scoped, tag = 'input window, operand 0, single buffered']
    #allocation3 [shape = 's32[1]{0}', space=sflag, size = 0x4, scoped, tag = 'scoped memory for tpu_custom_call.1']
    #allocation4 [shape = 's32[1]{0}', space=sflag, size = 0x4, scoped, tag = 'scoped memory for tpu_custom_call.1']
    #allocation5 [shape = 'u8[8192]{0}', space=vmem, size = 0x2000, scoped, tag = 'output window, operand 0, single buffered']
    %7 = vsyncpa [#allocation3], 0
    %8 = vsyncpa [#allocation4], 0
    // Predicated region
    $region2: #{tpu_custom_call.1} parent=1 // pred_check
      _
    $region3: #{tpu_custom_call.1} parent=1 // pred_check_branch
      %10 = sbr.rel (0) target = $region5
    $region4: #{tpu_custom_call.1} parent=1 // pred_region
      %12 = vsyncadd [#allocation3], 0
      %s13 = sshll.u32 %s0, 4
      %s14 = int_to_ptr.hbm [resolvable:$true] %s13
      %s15 = sshll.u32 [#allocation2], 4
      %s16 = int_to_ptr.vmem [resolvable:$true] %s15
      %21 = dma.hbm_to_vmem [thread:$0]  %s14, 256, %s16, [#allocation3], 128, 128, 8
    $region5: #{tpu_custom_call.1} parent=1 // pred_fallthru
      _
    // Predicated region
    $region6: #{tpu_custom_call.1} parent=1 // pred_check
      _
    $region7: #{tpu_custom_call.1} parent=1 // pred_check_branch
      %23 = sbr.rel (0) target = $region9
    $region8: #{tpu_custom_call.1} parent=1 // pred_region
      _
    $region9: #{tpu_custom_call.1} parent=1 // pred_fallthru
      _
    // Predicated region
    $region10: #{tpu_custom_call.1} parent=1 // pred_check
      _
    $region11: #{tpu_custom_call.1} parent=1 // pred_check_branch
      %25 = sbr.rel (0) target = $region13
    $region12: #{tpu_custom_call.1} parent=1 // pred_region
      %27 = dma.done [#allocation3], 256
    $region13: #{tpu_custom_call.1} parent=1 // pred_fallthru
      _
    %v28 = vld [vmem:[#allocation2] sm:$0xff]
    %v29 = vld [vmem:[#allocation2 + $0x8] sm:$0xff]
    %32 = vst [vmem:[#allocation1] ss:$2 sm:$0xff] %v28
    %v33 = vld.sshfl [vmem:[#allocation1] sm:$0xff pattern:$0x75316420]
    %v34 = vld.sshfl [vmem:[#allocation1 + $0x8] sm:$0xff pattern:$0x75316420]
    %s35 = scalar_lea.vmem [#allocation1], 16
    %36 = vst [vmem:[%s35] ss:$2 sm:$0xff] %v29
    %v37 = vld.sshfl [vmem:[#allocation1 + $0x10] sm:$0xff pattern:$0x75316420]
    %v38 = vld.sshfl [vmem:[#allocation1 + $0x18] sm:$0xff pattern:$0x75316420]
    %vm43 = vcmask 1043456
    %v44 = vsel %vm43, %v33, 0.0
    %v45 = vsel %vm43, %v37, 0.0
    %v46 = vadd.f32 %v44, %v45
    %v47 = vsel %vm43, %v34, 0.0
    %v48 = vsel %vm43, %v38, 0.0
    %v49 = vadd.f32 %v47, %v48
    %v50 = vsel %vm43, %v46, 0.0
    %v51 = vsel %vm43, %v49, 0.0
    %v52 = vadd.f32 %v50, %v51
    %53 = vadd.xlane.f32.xlu0 %v52
    %v54 = vpop.xlane.xlu0 %53
    %v55 = vmul.f32 %v54, 0.001953125
    %v58 = vunpack.c.l.s4 839922192
    %v59 = vunpack.c.0.s8 %v58
    %v60 = vperm.slane %v55, %v59
    %v62 = vsub.f32 %v28, %v60
    %v63 = vsub.f32 %v29, %v60
    %66 = vst [vmem:[#allocation1] ss:$2 sm:$0xff] %v62
    %v67 = vld.sshfl [vmem:[#allocation1] sm:$0xff pattern:$0x75316420]
    %v68 = vld.sshfl [vmem:[#allocation1 + $0x8] sm:$0xff pattern:$0x75316420]
    %s69 = scalar_lea.vmem [#allocation1], 16
    %70 = vst [vmem:[%s69] ss:$2 sm:$0xff] %v63
    %v71 = vld.sshfl [vmem:[#allocation1 + $0x10] sm:$0xff pattern:$0x75316420]
    %v72 = vld.sshfl [vmem:[#allocation1 + $0x18] sm:$0xff pattern:$0x75316420]
    %v77 = vsel %vm43, %v67, 0.0
    %v78 = vrot.slane %v77, 4
    %v79 = vadd.f32 %v77, %v78
    %v80 = vrot.slane %v79, 2
    %v81 = vadd.f32 %v79, %v80
    %v82 = vrot.slane %v81, 1
    %v83 = vadd.f32 %v81, %v82
    %v84 = vsel %vm43, %v68, 0.0
    %v85 = vrot.slane %v84, 4
    %v86 = vadd.f32 %v84, %v85
    %v87 = vrot.slane %v86, 2
    %v88 = vadd.f32 %v86, %v87
    %v89 = vrot.slane %v88, 1
    %v90 = vadd.f32 %v88, %v89
    %v91 = vsel %vm43, %v71, 0.0
    %v92 = vrot.slane %v91, 4
    %v93 = vadd.f32 %v91, %v92
    %v94 = vrot.slane %v93, 2
    %v95 = vadd.f32 %v93, %v94
    %v96 = vrot.slane %v95, 1
    %v97 = vadd.f32 %v95, %v96
    %v98 = vsel %vm43, %v72, 0.0
    %v99 = vrot.slane %v98, 4
    %v100 = vadd.f32 %v98, %v99
    %v101 = vrot.slane %v100, 2
    %v102 = vadd.f32 %v100, %v101
    %v103 = vrot.slane %v102, 1
    %v104 = vadd.f32 %v102, %v103
    %v105 = vrcp.pop 4.0
    %v106 = vmul.f32 4.0, %v105
    %v107 = vsub.f32 1.0, %v106
    %v108 = vmul.f32 %v105, %v107
    %v109 = vadd.f32 %v105, %v108
    %vm110 = vweird.f32 %v105
    %v111 = vsel %vm110, %v105, %v109
    %v112 = vmul.f32 %v83, %v111
    %v113 = vmul.f32 %v90, %v111
    %v114 = vmul.f32 %v97, %v111
    %v115 = vmul.f32 %v104, %v111
    %v120 = vrot.slane %v113, 4
    %v121 = vrot.slane %v115, 4
    %v122 = vsel %vm43, %v112, %v120
    %v123 = vsel %vm43, %v114, %v121
    %v126 = vsub.f32 %v62, %v122
    %v127 = vsub.f32 %v63, %v123
    %v128 = vmul.f32 %v126, %v126
    %v129 = vmul.f32 %v127, %v127
    %132 = vst [vmem:[#allocation1] ss:$2 sm:$0xff] %v128
    %v133 = vld.sshfl [vmem:[#allocation1] sm:$0xff pattern:$0x75316420]
    %v134 = vld.sshfl [vmem:[#allocation1 + $0x8] sm:$0xff pattern:$0x75316420]
    %s135 = scalar_lea.vmem [#allocation1], 16
    %136 = vst [vmem:[%s135] ss:$2 sm:$0xff] %v129
    %v137 = vld.sshfl [vmem:[#allocation1 + $0x10] sm:$0xff pattern:$0x75316420]
    %v138 = vld.sshfl [vmem:[#allocation1 + $0x18] sm:$0xff pattern:$0x75316420]
    %v143 = vsel %vm43, %v133, 0.0
    %v144 = vrot.slane %v143, 4
    %v145 = vadd.f32 %v143, %v144
    %v146 = vrot.slane %v145, 2
    %v147 = vadd.f32 %v145, %v146
    %v148 = vrot.slane %v147, 1
    %v149 = vadd.f32 %v147, %v148
    %v150 = vsel %vm43, %v134, 0.0
    %v151 = vrot.slane %v150, 4
    %v152 = vadd.f32 %v150, %v151
    %v153 = vrot.slane %v152, 2
    %v154 = vadd.f32 %v152, %v153
    %v155 = vrot.slane %v154, 1
    %v156 = vadd.f32 %v154, %v155
    %v157 = vsel %vm43, %v137, 0.0
    %v158 = vrot.slane %v157, 4
    %v159 = vadd.f32 %v157, %v158
    %v160 = vrot.slane %v159, 2
    %v161 = vadd.f32 %v159, %v160
    %v162 = vrot.slane %v161, 1
    %v163 = vadd.f32 %v161, %v162
    %v164 = vsel %vm43, %v138, 0.0
    %v165 = vrot.slane %v164, 4
    %v166 = vadd.f32 %v164, %v165
    %v167 = vrot.slane %v166, 2
    %v168 = vadd.f32 %v166, %v167
    %v169 = vrot.slane %v168, 1
    %v170 = vadd.f32 %v168, %v169
    %v171 = vmul.f32 %v149, %v111
    %v172 = vmul.f32 %v156, %v111
    %v173 = vmul.f32 %v163, %v111
    %v174 = vmul.f32 %v170, %v111
    %v175 = vadd.f32 %v171, 1e-05
    %v176 = vadd.f32 %v172, 1e-05
    %v177 = vadd.f32 %v173, 1e-05
    %v178 = vadd.f32 %v174, 1e-05
    %v179 = vrsqrt.pop %v175
    %v180 = vmul.f32 %v179, %v175
    %v181 = vmul.f32 %v180, %v179
    %v182 = vmul.f32 0.5, %v181
    %v183 = vsub.f32 1.5, %v182
    %v184 = vmul.f32 %v179, %v183
    %vm185 = vweird.f32 %v175
    %vm186 = vweird.f32 %v179
    %vm187 = vmor %vm185, %vm186
    %v188 = vsel %vm187, %v179, %v184
    %v189 = vrsqrt.pop %v176
    %v190 = vmul.f32 %v189, %v176
    %v191 = vmul.f32 %v190, %v189
    %v192 = vmul.f32 0.5, %v191
    %v193 = vsub.f32 1.5, %v192
    %v194 = vmul.f32 %v189, %v193
    %vm195 = vweird.f32 %v176
    %vm196 = vweird.f32 %v189
    %vm197 = vmor %vm195, %vm196
    %v198 = vsel %vm197, %v189, %v194
    %v199 = vrsqrt.pop %v177
    %v200 = vmul.f32 %v199, %v177
    %v201 = vmul.f32 %v200, %v199
    %v202 = vmul.f32 0.5, %v201
    %v203 = vsub.f32 1.5, %v202
    %v204 = vmul.f32 %v199, %v203
    %vm205 = vweird.f32 %v177
    %vm206 = vweird.f32 %v199
    %vm207 = vmor %vm205, %vm206
    %v208 = vsel %vm207, %v199, %v204
    %v209 = vrsqrt.pop %v178
    %v210 = vmul.f32 %v209, %v178
    %v211 = vmul.f32 %v210, %v209
    %v212 = vmul.f32 0.5, %v211
    %v213 = vsub.f32 1.5, %v212
    %v214 = vmul.f32 %v209, %v213
    %vm215 = vweird.f32 %v178
    %vm216 = vweird.f32 %v209
    %vm217 = vmor %vm215, %vm216
    %v218 = vsel %vm217, %v209, %v214
    %v219 = vld [vmem:[%s1] sm:$0xf]
    %v220 = vld [vmem:[%s1 + $0x4] sm:$0xf]
    %v225 = vrot.slane %v198, 4
    %v226 = vrot.slane %v218, 4
    %v227 = vsel %vm43, %v188, %v225
    %v228 = vsel %vm43, %v208, %v226
    %v231 = vmul.f32 %v126, %v227
    %v232 = vmul.f32 %v127, %v228
    %234 = vset.pattern.permute.xlu0 0
    %235 = vperm.xlu0 %234, %v219
    %v236 = vpop.permute.xlu0 %235
    %v238 = vunpack.c.l.s4 839922192
    %v239 = vunpack.c.0.s8 %v238
    %v240 = vperm.slane %v236, %v239
    %v242 = vmul.f32 %v231, %v240
    %v243 = vmul.f32 %v232, %v240
    %245 = vset.pattern.permute.xlu0 0
    %246 = vperm.xlu0 %245, %v220
    %v247 = vpop.permute.xlu0 %246
    %v249 = vunpack.c.l.s4 839922192
    %v250 = vunpack.c.0.s8 %v249
    %v251 = vperm.slane %v247, %v250
    %v253 = vadd.f32 %v242, %v251
    %v254 = vadd.f32 %v243, %v251
    %255 = vst [vmem:[#allocation5] sm:$0xff] %v253
    %256 = vst [vmem:[#allocation5 + $0x8] sm:$0xff] %v254
    // Predicated region
    $region14: #{tpu_custom_call.1} parent=1 // pred_check
      _
    $region15: #{tpu_custom_call.1} parent=1 // pred_check_branch
      %258 = sbr.rel (0) target = $region17
    $region16: #{tpu_custom_call.1} parent=1 // pred_region
      %260 = vsyncadd [#allocation4], 0
      %s261 = sshll.u32 [#allocation5], 4
      %s262 = int_to_ptr.vmem [resolvable:$true] %s261
      %s263 = sshll.u32 %s2, 4
      %s264 = int_to_ptr.hbm [resolvable:$true] %s263
      %269 = dma.vmem_to_hbm [thread:$0]  %s262, 256, %s264, [#allocation4], 128, 128, 8
    $region17: #{tpu_custom_call.1} parent=1 // pred_fallthru
      _
    // Predicated region
    $region18: #{tpu_custom_call.1} parent=1 // pred_check
      _
    $region19: #{tpu_custom_call.1} parent=1 // pred_check_branch
      %271 = sbr.rel (0) target = $region21
    $region20: #{tpu_custom_call.1} parent=1 // pred_region
      %273 = dma.done [#allocation4], 256
    $region21: #{tpu_custom_call.1} parent=1 // pred_fallthru
      _
    %274 = vsyncpa [#allocation3], 1
    %275 = vsyncpa [#allocation4], 1

</llo_original>
